<compile_context>
chip_gen: v6e
topology: v6e:2x2x1
jax: 0.10.0
libtpu: 0.0.40
codegen_flags: <defaults>
</compile_context>

<pallas_src>
import jax
import jax.numpy as jnp
from jax.experimental import pallas as pl
from jax.experimental.pallas import tpu as pltpu

_MAX_INFLIGHT = 16  # concurrent row DMAs per grid step (ring of DMA semaphores)


def _gather_kernel(ids_ref, table_hbm, out_ref, buf, sem):
    """Gather TB embedding rows from the HBM table into one output block.

    ids_ref:   SMEM int32[n_total]   (scalar-prefetched, flattened token ids)
    table_hbm: HBM  f32[V, D]        (raw ref, memory_space=pl.ANY)
    out_ref:   VMEM f32[TB, D]       (pipelined output block)
    buf:       VMEM f32[TB, D]       (DMA landing buffer)
    sem:       DMA semaphores (nslots,)
    """
    tb = out_ref.shape[0]
    nslots = sem.shape[0]          # nslots <= tb by construction
    base = pl.program_id(0) * tb

    def start_copy(t, slot):
        row = ids_ref[base + t]
        pltpu.make_async_copy(
            table_hbm.at[pl.ds(row, 1), :],
            buf.at[pl.ds(t, 1), :],
            sem.at[slot],
        ).start()

    def wait_copy(t, slot):
        # The wait only needs the dst shape + semaphore; src index is irrelevant.
        pltpu.make_async_copy(
            table_hbm.at[pl.ds(0, 1), :],
            buf.at[pl.ds(t, 1), :],
            sem.at[slot],
        ).wait()

    # Prologue: fill the DMA pipeline.
    @pl.loop(0, nslots)
    def _(t):
        start_copy(t, t % nslots)

    # Steady state: retire the oldest copy on a slot, reuse the slot.
    if tb > nslots:
        @pl.loop(nslots, tb)
        def _(t):
            slot = t % nslots
            wait_copy(t - nslots, slot)
            start_copy(t, slot)

    # Epilogue: retire the last nslots copies.
    @pl.loop(tb - nslots, tb)
    def _(t):
        wait_copy(t, t % nslots)

    # All rows landed in VMEM; emit the lane-dense output block.
    out_ref[...] = buf[...]


def _round_up(x, m):
    return (x + m - 1) // m * m


def embedding_collection_forward(input_x, table, *, token_block=256):
    """Pallas equivalent of EmbeddingCollection.forward.

    input_x: int[B, S] token ids
    table:   f32[V, D] embedding weights (stays in HBM)
    returns: (f32[B, S, D], f32[B, S, D]) -- the same tensor twice, as in torch.
    """
    B, S = input_x.shape
    V, D = table.shape
    N = B * S

    # int64 -> int32 is safe while vocab indices fit in int32 (always true in
    # practice).  Clamp so a bad id can never produce an out-of-bounds DMA
    # (torch nn.Embedding would raise instead).
    ids = jnp.clip(input_x.reshape(N).astype(jnp.int32), 0, V - 1)

    # Token block: big enough to amortize per-step overhead, but collapse tiny
    # problems (like the test shape) into a single grid step.  Must be a
    # multiple of 8 for the (8, 128) output-block constraint.
    tb = _round_up(min(token_block, _round_up(N, 8)), 8)
    n_total = _round_up(N, tb)
    if n_total != N:
        ids = jnp.concatenate(
            [ids, jnp.zeros((n_total - N,), jnp.int32)], axis=0
        )

    grid = (n_total // tb,)
    nslots = min(_MAX_INFLIGHT, tb)

    out_flat = pl.pallas_call(
        _gather_kernel,
        out_shape=jax.ShapeDtypeStruct((n_total, D), table.dtype),
        grid_spec=pltpu.PrefetchScalarGridSpec(
            num_scalar_prefetch=1,                       # ids -> SMEM
            grid=grid,
            in_specs=[pl.BlockSpec(memory_space=pl.ANY)],  # table stays in HBM
            out_specs=pl.BlockSpec((tb, D), lambda i, ids_ref: (i, 0)),
            scratch_shapes=[
                pltpu.VMEM((tb, D), table.dtype),        # DMA landing buffer
                pltpu.SemaphoreType.DMA((nslots,)),      # in-flight DMA ring
            ],
        ),
        compiler_params=pltpu.CompilerParams(
            dimension_semantics=("parallel",),           # megacore on v7x
        ),
    )(ids, table)

    emb = out_flat if n_total == N else out_flat[:N]
    emb = emb.reshape(B, S, D)
    # Module returns the embedding twice (word vec & "position" vec share it).
    return emb, emb


if __name__ == "__main__":
    # Small, deterministic shapes: vocab=64, embed_dim=128, batch=2, seq=8.
    input_dim = 64       # vocabulary size
    embedding_dim = 128
    B, S = 2, 8

    key = jax.random.PRNGKey(0)
    k_tab, k_ids = jax.random.split(key)

    # Deterministic "nn.Embedding" weight init (normal(0,1), like torch default).
    table = jax.random.normal(k_tab, (input_dim, embedding_dim), dtype=jnp.float32)
    input_x = jax.random.randint(k_ids, (B, S), 0, input_dim, dtype=jnp.int32)

    emb_a, emb_b = embedding_collection_forward(input_x, table)
    jax.block_until_ready((emb_a, emb_b))

    # Correctness check against plain-JAX gather (reference semantics).
    ref = table[input_x]
    assert emb_a.shape == (B, S, embedding_dim)
    assert jnp.allclose(emb_a, ref, atol=1e-6), "mismatch vs reference gather"
    assert jnp.allclose(emb_b, ref, atol=1e-6), "mismatch vs reference gather"

    print("KERNEL_OK")
</pallas_src>

<mosaic_0001>
module attributes {stable_mosaic.version = 11 : i64} {
  func.func @_gather_kernel(%arg0: i32, %arg1: memref<16xi32, #tpu.memory_space<smem>>, %arg2: memref<64x128xf32, #tpu.memory_space<any>>, %arg3: memref<16x128xf32, #tpu.memory_space<vmem>>, %arg4: memref<16x128xf32, #tpu.memory_space<vmem>>, %arg5: memref<16x!tpu.dma_semaphore, #tpu.memory_space<semaphore_mem>>) attributes {dimension_semantics = [#tpu.dimension_semantics<parallel>], iteration_bounds = array<i64: 1>, scalar_prefetch = 1 : i64, scratch_operands = 2 : i64, tpu.core_type = #tpu.core_type<tc>, window_params = [{}, {transform_indices = @transform_1, window_bounds = array<i64: 16, 128>}]} {
    %c16_i32 = arith.constant 16 : i32
    %0 = arith.muli %arg0, %c16_i32 : i32
    %c0_i32 = arith.constant 0 : i32
    %c16_i32_0 = arith.constant 16 : i32
    %1 = arith.addi %c0_i32, %c16_i32_0 : i32
    %c1_i32 = arith.constant 1 : i32
    scf.for %arg6 = %c0_i32 to %1 step %c1_i32  : i32 {
      %c1_i32_9 = arith.constant 1 : i32
      %5 = arith.muli %arg6, %c1_i32_9 : i32
      %c0_i32_10 = arith.constant 0 : i32
      %6 = arith.addi %c0_i32_10, %5 : i32
      %c16_i32_11 = arith.constant 16 : i32
      %c0_i32_12 = arith.constant 0 : i32
      %7 = arith.cmpi eq, %c16_i32_11, %c0_i32_12 : i32
      %c1_i32_13 = arith.constant 1 : i32
      %8 = arith.select %7, %c1_i32_13, %c16_i32_11 : i32
      %9 = arith.remsi %6, %8 : i32
      %c0_i32_14 = arith.constant 0 : i32
      %10 = arith.cmpi ne, %9, %c0_i32_14 : i32
      %c0_i32_15 = arith.constant 0 : i32
      %11 = arith.cmpi slt, %9, %c0_i32_15 : i32
      %c0_i32_16 = arith.constant 0 : i32
      %12 = arith.cmpi slt, %8, %c0_i32_16 : i32
      %13 = arith.xori %11, %12 : i1
      %14 = arith.andi %13, %10 : i1
      %15 = arith.addi %9, %8 : i32
      %16 = arith.select %14, %15, %9 : i32
      %17 = arith.addi %0, %6 : i32
      %18 = arith.index_cast %17 : i32 to index
      %19 = memref.load %arg1[%18] : memref<16xi32, #tpu.memory_space<smem>>
      %c0_i32_17 = arith.constant 0 : i32
      %20 = tpu.memref_slice %arg2[%19, %c0_i32_17] : memref<64x128xf32, #tpu.memory_space<any>> -> memref<1x128xf32, #tpu.memory_space<any>>
      %c0_i32_18 = arith.constant 0 : i32
      %21 = tpu.memref_slice %arg4[%6, %c0_i32_18] : memref<16x128xf32, #tpu.memory_space<vmem>> -> memref<1x128xf32, #tpu.memory_space<vmem>>
      %22 = tpu.memref_slice %arg5[%16] : memref<16x!tpu.dma_semaphore, #tpu.memory_space<semaphore_mem>> -> memref<1x!tpu.dma_semaphore, #tpu.memory_space<semaphore_mem>>
      %23 = tpu.memref_squeeze %22 : memref<1x!tpu.dma_semaphore, #tpu.memory_space<semaphore_mem>> -> memref<!tpu.dma_semaphore, #tpu.memory_space<semaphore_mem>>
      tpu.enqueue_dma source(%20 : memref<1x128xf32, #tpu.memory_space<any>>) target(%21 : memref<1x128xf32, #tpu.memory_space<vmem>>) target_semaphore(%23 : memref<!tpu.dma_semaphore, #tpu.memory_space<semaphore_mem>>)
    }
    %c16_i32_1 = arith.constant 16 : i32
    %c0_i32_2 = arith.constant 0 : i32
    %c16_i32_3 = arith.constant 16 : i32
    %2 = arith.addi %c0_i32_2, %c16_i32_3 : i32
    %c1_i32_4 = arith.constant 1 : i32
    scf.for %arg6 = %c0_i32_2 to %2 step %c1_i32_4  : i32 {
      %c1_i32_9 = arith.constant 1 : i32
      %5 = arith.muli %arg6, %c1_i32_9 : i32
      %c0_i32_10 = arith.constant 0 : i32
      %6 = arith.addi %c0_i32_10, %5 : i32
      %c16_i32_11 = arith.constant 16 : i32
      %c0_i32_12 = arith.constant 0 : i32
      %7 = arith.cmpi eq, %c16_i32_11, %c0_i32_12 : i32
      %c1_i32_13 = arith.constant 1 : i32
      %8 = arith.select %7, %c1_i32_13, %c16_i32_11 : i32
      %9 = arith.remsi %6, %8 : i32
      %c0_i32_14 = arith.constant 0 : i32
      %10 = arith.cmpi ne, %9, %c0_i32_14 : i32
      %c0_i32_15 = arith.constant 0 : i32
      %11 = arith.cmpi slt, %9, %c0_i32_15 : i32
      %c0_i32_16 = arith.constant 0 : i32
      %12 = arith.cmpi slt, %8, %c0_i32_16 : i32
      %13 = arith.xori %11, %12 : i1
      %14 = arith.andi %13, %10 : i1
      %15 = arith.addi %9, %8 : i32
      %16 = arith.select %14, %15, %9 : i32
      %c0_i32_17 = arith.constant 0 : i32
      %c0_i32_18 = arith.constant 0 : i32
      %17 = tpu.memref_slice %arg2[%c0_i32_17, %c0_i32_18] : memref<64x128xf32, #tpu.memory_space<any>> -> memref<1x128xf32, #tpu.memory_space<any>>
      %c0_i32_19 = arith.constant 0 : i32
      %18 = tpu.memref_slice %arg4[%6, %c0_i32_19] : memref<16x128xf32, #tpu.memory_space<vmem>> -> memref<1x128xf32, #tpu.memory_space<vmem>>
      %19 = tpu.memref_slice %arg5[%16] : memref<16x!tpu.dma_semaphore, #tpu.memory_space<semaphore_mem>> -> memref<1x!tpu.dma_semaphore, #tpu.memory_space<semaphore_mem>>
      %20 = tpu.memref_squeeze %19 : memref<1x!tpu.dma_semaphore, #tpu.memory_space<semaphore_mem>> -> memref<!tpu.dma_semaphore, #tpu.memory_space<semaphore_mem>>
      tpu.wait_dma2 semaphore(%20 : memref<!tpu.dma_semaphore, #tpu.memory_space<semaphore_mem>>) src(%17 : memref<1x128xf32, #tpu.memory_space<any>>) dst(%18 : memref<1x128xf32, #tpu.memory_space<vmem>>)
    }
    %c16_i32_5 = arith.constant 16 : i32
    %c0 = arith.constant 0 : index
    %c0_6 = arith.constant 0 : index
    %3 = vector.load %arg4[%c0, %c0_6] : memref<16x128xf32, #tpu.memory_space<vmem>>, vector<16x128xf32>
    %c0_7 = arith.constant 0 : index
    %c0_8 = arith.constant 0 : index
    %4 = vector.load %arg3[%c0_7, %c0_8] : memref<16x128xf32, #tpu.memory_space<vmem>>, vector<16x128xf32>
    tpu.vector_store %arg3[%c0_7, %c0_8], %3 {strides = array<i32>} : memref<16x128xf32, #tpu.memory_space<vmem>>, vector<16x128xf32>,
    return
  }
  func.func @transform_1(%arg0: i32, %arg1: memref<16xi32, #tpu.memory_space<smem>>) -> (i32, i32) {
    %c0_i32 = arith.constant 0 : i32
    %c0_i32_0 = arith.constant 0 : i32
    return %arg0, %c0_i32 : i32, i32
  }
}

</mosaic_0001>

<llo_original>
// kernel: tpu_custom_call.1
$region0: #{tpu_custom_call.1}
  #allocation0 [shape = 'u32[]', space=smem, size = 0x4, offset = 0x4, fixed_abs, tag = 'smem constant byte address 0x4 - core index']
  #allocation1 [shape = 'u32[144,128]{1,0:T(1,128)}', space=vmem, size = 0x12000, scoped, tag = 'internal scratch']
  #allocation2 [shape = 'f32[16,128]{1,0:T(8,128)}', space=vmem, size = 0x2000, scoped, tag = 'scratch operand']
  #allocation3 [shape = 's32[16]{0}', space=sflag, size = 0x40, scoped, tag = 'scratch operand']
  #allocation4 [shape = 's32[1]{0}', space=sflag, size = 0x4, scoped, tag = 'scoped memory for tpu_custom_call.1']
  #allocation5 [shape = 'u8[512]{0}', space=smem, size = 0x200, scoped, tag = 'prefetched SMEM operand 0']
  #allocation8 [shape = 's32[]', space=sflag, size = 0x4, offset = 0, fixed_abs, tag = 'sflag constant byte address 0x0 - dummy sync flag']
  #allocation9 [shape = 's32[]', space=sflag, size = 0x4, offset = 0, fixed_abs, tag = 'sflag constant byte address 0x0 - dummy sync flag']
  #allocation10 [shape = 'u32[]', space=smem, size = 0x4, offset = 0x44, fixed_abs, tag = 'smem constant byte address 0x44 - assertion arg 0']
  #allocation11 [shape = 'u32[]', space=smem, size = 0x4, offset = 0x48, fixed_abs, tag = 'smem constant byte address 0x48 - assertion arg 1']
  %s0 = inlined_call_operand.hbm [shape: s32[16], index: 0, kind: input, shape index: {}]
  %s1 = inlined_call_operand.hbm [shape: f32[64,128], index: 1, kind: input, shape index: {}]
  %s2 = inlined_call_operand.hbm [shape: f32[16,128], index: 2, kind: output, shape index: {}]
  %s3 = sld [smem:[#allocation0]]
  $region28: #{tpu_custom_call.1} parent=0
    _
  %s5 = ssub.s32 1, %s3
  %s6 = scalar_select 0, %s5, %s3
  %8 = dma.hbm_to_smem %s0, 16, [#allocation5], [#allocation4]
  %9 = dma.done [#allocation4], 16
  %10 = sfence
  $region1: #{tpu_custom_call.1} parent=0
    #allocation6 [shape = 'u8[8192]{0}', space=vmem, size = 0x2000, scoped, tag = 'output window, operand 0, single buffered']
    #allocation7 [shape = 's32[1]{0}', space=sflag, size = 0x4, scoped, tag = 'scoped memory for tpu_custom_call.1']
    %11 = vsyncpa [#allocation7], 0
    %s12 = smul.u32 0, 16
    loop: start=0, step=1, limit=16
    $region2: #{tpu_custom_call.1} parent=1 // loop_pre_header
      _
    $region3: #{tpu_custom_call.1} parent=1 // loop_header
      %s14 = sphi 0, %s18
      %p15 = scmp.ge.s32.totalorder %s14, 16
    $region4: #{tpu_custom_call.1} parent=1 // loop_header_branch
      %17 = sbr.rel (%p15) target = $region8
    $region5: #{tpu_custom_call.1} parent=1 // loop_body
      %p19 = scmp.lt.s32.totalorder %s14, 0
      %s20 = ssub.s32 0, %s14
      %s21 = scalar_select %p19, %s20, %s14
      %s22 = sand.u32 %s21, 15
      %s23 = ssub.s32 0, %s22
      %s24 = scalar_select %p19, %s23, %s22
      %p25 = scmp.ne.s32.totalorder %s24, 0
      %p26 = scmp.lt.s32.totalorder %s24, 0
      %p27 = pnand %p26, %p25
      %p28 = pneg %p27
      %s29 = sadd.s32 %s24, 16
      %s30 = scalar_select %p28, %s29, %s24
      %s31 = sadd.s32 %s12, %s14
      %s32 = sld [smem:[#allocation5 + %s31]]
      %s33 = smul.addr %s32, 16
      %s34 = scalar_lea.hbm %s1, %s33
      %s35 = scalar_lea.vmem [#allocation2], %s14
      %s36 = scalar_lea.sflag [#allocation3], %s30
      // Predicated region
      $region9: #{tpu_custom_call.1} parent=5 // pred_check
        _
      $region10: #{tpu_custom_call.1} parent=5 // pred_check_branch
        %38 = sbr.rel target = $region12
      $region11: #{tpu_custom_call.1} parent=5 // pred_region
        %39 = sst [smem:[#allocation10]] [#allocation9]
        %40 = sst [smem:[#allocation11]] [#allocation8]
      $region12: #{tpu_custom_call.1} parent=5 // pred_fallthru
        _
      %42 = shalt.err (0)
      %s44 = sshll.u32 %s35, 4
      %s45 = int_to_ptr.vmem [resolvable:$true] %s44
      %47 = dma.hbm_to_vmem [thread:$0]  %s34, 16, %s45, %s36
    $region6: #{tpu_custom_call.1} parent=1 // loop_footer
      %s18 = sadd.s32 1, %s14
    $region7: #{tpu_custom_call.1} parent=1 // loop_footer_branch
      %13 = sbr.rel target = $region3
    $region8: #{tpu_custom_call.1} parent=1 // loop_exit
      _
    loop: start=0, step=1, limit=16
    $region13: #{tpu_custom_call.1} parent=1 // loop_pre_header
      _
    $region14: #{tpu_custom_call.1} parent=1 // loop_header
      %s49 = sphi 0, %s53
      %p50 = scmp.ge.s32.totalorder %s49, 16
    $region15: #{tpu_custom_call.1} parent=1 // loop_header_branch
      %52 = sbr.rel (%p50) target = $region19
    $region16: #{tpu_custom_call.1} parent=1 // loop_body
      %p54 = scmp.lt.s32.totalorder %s49, 0
      %s55 = ssub.s32 0, %s49
      %s56 = scalar_select %p54, %s55, %s49
      %s57 = sand.u32 %s56, 15
      %s58 = ssub.s32 0, %s57
      %s59 = scalar_select %p54, %s58, %s57
      %p60 = scmp.ne.s32.totalorder %s59, 0
      %p61 = scmp.lt.s32.totalorder %s59, 0
      %p62 = pnand %p61, %p60
      %p63 = pneg %p62
      %s64 = sadd.s32 %s59, 16
      %s65 = scalar_select %p63, %s64, %s59
      %s66 = scalar_lea.sflag [#allocation3], %s65
      %s67 = smul.u32 1, 1
      %s68 = sshll.u32 %s67, 4
      %69 = dma.done %s66, %s68
    $region17: #{tpu_custom_call.1} parent=1 // loop_footer
      %s53 = sadd.s32 1, %s49
    $region18: #{tpu_custom_call.1} parent=1 // loop_footer_branch
      %48 = sbr.rel target = $region14
    $region19: #{tpu_custom_call.1} parent=1 // loop_exit
      _
    %v70 = vld [vmem:[#allocation2] sm:$0xff]
    %v71 = vld [vmem:[#allocation2 + $0x8] sm:$0xff]
    %72 = vst [vmem:[#allocation6] sm:$0xff] %v70
    %73 = vst [vmem:[#allocation6 + $0x8] sm:$0xff] %v71
    // Predicated region
    $region20: #{tpu_custom_call.1} parent=1 // pred_check
      _
    $region21: #{tpu_custom_call.1} parent=1 // pred_check_branch
      %75 = sbr.rel (0) target = $region23
    $region22: #{tpu_custom_call.1} parent=1 // pred_region
      %s77 = ssub.s32 256, 256
      %78 = vsyncadd [#allocation7], %s77
      %s79 = sshll.u32 [#allocation6], 4
      %s80 = int_to_ptr.vmem [resolvable:$true] %s79
      %85 = dma.vmem_to_hbm [thread:$0]  %s80, 256, %s2, [#allocation7], 128, 128, 8
    $region23: #{tpu_custom_call.1} parent=1 // pred_fallthru
      _
    // Predicated region
    $region24: #{tpu_custom_call.1} parent=1 // pred_check
      _
    $region25: #{tpu_custom_call.1} parent=1 // pred_check_branch
      %87 = sbr.rel (0) target = $region27
    $region26: #{tpu_custom_call.1} parent=1 // pred_region
      %88 = dma.done [#allocation7], 256
    $region27: #{tpu_custom_call.1} parent=1 // pred_fallthru
      _
    %89 = vsyncpa [#allocation7], 1
  %90 = vsyncmov [#allocation3]
  %s91 = vpop.sfrf %90
  %p92 = scmp.eq.s32.totalorder %s91, 0
  %p93 = pneg %p92
  %95 = shalt.err (%p93)
  %s96 = scalar_lea.sflag [#allocation3], 1
  %97 = vsyncmov %s96
  %s98 = vpop.sfrf %97
  %p99 = scmp.eq.s32.totalorder %s98, 0
  %p100 = pneg %p99
  %102 = shalt.err (%p100)
  %s103 = scalar_lea.sflag [#allocation3], 2
  %104 = vsyncmov %s103
  %s105 = vpop.sfrf %104
  %p106 = scmp.eq.s32.totalorder %s105, 0
  %p107 = pneg %p106
  %109 = shalt.err (%p107)
  %s110 = scalar_lea.sflag [#allocation3], 3
  %111 = vsyncmov %s110
  %s112 = vpop.sfrf %111
  %p113 = scmp.eq.s32.totalorder %s112, 0
  %p114 = pneg %p113
  %116 = shalt.err (%p114)
  %s117 = scalar_lea.sflag [#allocation3], 4
  %118 = vsyncmov %s117
  %s119 = vpop.sfrf %118
  %p120 = scmp.eq.s32.totalorder %s119, 0
  %p121 = pneg %p120
  %123 = shalt.err (%p121)
  %s124 = scalar_lea.sflag [#allocation3], 5
  %125 = vsyncmov %s124
  %s126 = vpop.sfrf %125
  %p127 = scmp.eq.s32.totalorder %s126, 0
  %p128 = pneg %p127
  %130 = shalt.err (%p128)
  %s131 = scalar_lea.sflag [#allocation3], 6
  %132 = vsyncmov %s131
  %s133 = vpop.sfrf %132
  %p134 = scmp.eq.s32.totalorder %s133, 0
  %p135 = pneg %p134
  %137 = shalt.err (%p135)
  %s138 = scalar_lea.sflag [#allocation3], 7
  %139 = vsyncmov %s138
  %s140 = vpop.sfrf %139
  %p141 = scmp.eq.s32.totalorder %s140, 0
  %p142 = pneg %p141
  %144 = shalt.err (%p142)
  %s145 = scalar_lea.sflag [#allocation3], 8
  %146 = vsyncmov %s145
  %s147 = vpop.sfrf %146
  %p148 = scmp.eq.s32.totalorder %s147, 0
  %p149 = pneg %p148
  %151 = shalt.err (%p149)
  %s152 = scalar_lea.sflag [#allocation3], 9
  %153 = vsyncmov %s152
  %s154 = vpop.sfrf %153
  %p155 = scmp.eq.s32.totalorder %s154, 0
  %p156 = pneg %p155
  %158 = shalt.err (%p156)
  %s159 = scalar_lea.sflag [#allocation3], 10
  %160 = vsyncmov %s159
  %s161 = vpop.sfrf %160
  %p162 = scmp.eq.s32.totalorder %s161, 0
  %p163 = pneg %p162
  %165 = shalt.err (%p163)
  %s166 = scalar_lea.sflag [#allocation3], 11
  %167 = vsyncmov %s166
  %s168 = vpop.sfrf %167
  %p169 = scmp.eq.s32.totalorder %s168, 0
  %p170 = pneg %p169
  %172 = shalt.err (%p170)
  %s173 = scalar_lea.sflag [#allocation3], 12
  %174 = vsyncmov %s173
  %s175 = vpop.sfrf %174
  %p176 = scmp.eq.s32.totalorder %s175, 0
  %p177 = pneg %p176
  %179 = shalt.err (%p177)
  %s180 = scalar_lea.sflag [#allocation3], 13
  %181 = vsyncmov %s180
  %s182 = vpop.sfrf %181
  %p183 = scmp.eq.s32.totalorder %s182, 0
  %p184 = pneg %p183
  %186 = shalt.err (%p184)
  %s187 = scalar_lea.sflag [#allocation3], 14
  %188 = vsyncmov %s187
  %s189 = vpop.sfrf %188
  %p190 = scmp.eq.s32.totalorder %s189, 0
  %p191 = pneg %p190
  %193 = shalt.err (%p191)
  %s194 = scalar_lea.sflag [#allocation3], 15
  %195 = vsyncmov %s194
  %s196 = vpop.sfrf %195
  %p197 = scmp.eq.s32.totalorder %s196, 0
  %p198 = pneg %p197
  %200 = shalt.err (%p198)

</llo_original>
